<compile_context>
chip_gen: v7x
topology: tpu7x:2x2x1
jax: 0.10.0
libtpu: 0.0.40
codegen_flags: <defaults>
</compile_context>

<pallas_src>
import math

import jax
import jax.numpy as jnp
from jax.experimental import pallas as pl
from jax.experimental.pallas import tpu as pltpu


def _round_up(x, m):
    return ((x + m - 1) // m) * m


# --------------------------------------------------------------------------------------
# Pallas kernels: fused two-stage low-rank matmul (+ optional bias add)
# --------------------------------------------------------------------------------------
def _low_rank_kernel_bias(x_ref, at_ref, bt_ref, bias_ref, o_ref):
    # x_ref:    [TM, K]   streamed tile of the flattened input (per M tile)
    # at_ref:   [K, R]    A[:r, :].T (zero-padded), VMEM-resident across the grid
    # bt_ref:   [R, TN]   B[:, :r].T tile (zero-padded), streamed per N tile
    # bias_ref: [1, TN]   streamed per N tile
    # o_ref:    [TM, TN]
    h = jnp.dot(x_ref[...], at_ref[...], preferred_element_type=jnp.float32)
    y = jnp.dot(h.astype(bt_ref.dtype), bt_ref[...], preferred_element_type=jnp.float32)
    o_ref[...] = (y + bias_ref[...].astype(jnp.float32)).astype(o_ref.dtype)


def _low_rank_kernel_nobias(x_ref, at_ref, bt_ref, o_ref):
    h = jnp.dot(x_ref[...], at_ref[...], preferred_element_type=jnp.float32)
    y = jnp.dot(h.astype(bt_ref.dtype), bt_ref[...], preferred_element_type=jnp.float32)
    o_ref[...] = y.astype(o_ref.dtype)


# --------------------------------------------------------------------------------------
# Tile selection: biggest M tile that keeps double-buffered tiles + resident A^T in VMEM
# --------------------------------------------------------------------------------------
def _choose_tiles(m_pad, n_pad, k_pad, r_pad, itemsize, tile_m=None):
    # N tile: keep the whole output width resident if it is lane-friendly and small,
    # otherwise stream it in 512-wide chunks.
    tn = n_pad if n_pad <= 1024 else 512
    if tile_m is not None:
        return int(min(_round_up(tile_m, 128), m_pad)), int(tn)
    budget = 24 * 1024 * 1024  # conservative: fits v5e/v6e/v7x scoped VMEM comfortably
    fixed = 2 * (k_pad * r_pad + r_pad * tn + 8 * tn) * itemsize  # A^T + B^T tile + bias
    per_row = 2 * (k_pad + tn) * itemsize                         # dbl-buffered x row + out row
    avail = budget - fixed
    if avail <= per_row * 128:
        tm = 128
    else:
        tm = (avail // per_row) // 128 * 128
    tm = max(128, min(tm, 1024))  # 512-1024 already saturates HBM BW; bigger just eats VMEM
    return int(min(tm, m_pad)), int(tn)


# --------------------------------------------------------------------------------------
# Wrapper: padding, tile selection, pallas_call
# --------------------------------------------------------------------------------------
def low_rank_matmul(x2d, a_r, b_r, bias, tile_m=None):
    """y = (x2d @ a_r.T) @ b_r.T (+ bias), tiled over (M, N) inside one Pallas kernel."""
    M, K = x2d.shape
    r = a_r.shape[0]
    N = b_r.shape[0]
    dtype = x2d.dtype
    itemsize = jnp.dtype(dtype).itemsize

    # 128-aligned buckets for contraction / lane dims: lane-dense tiles, stable shapes.
    K_pad = _round_up(K, 128)
    R_pad = _round_up(max(r, 1), 128)
    N_pad = _round_up(N, 128)
    M_pad = _round_up(M, 128)

    TM, TN = _choose_tiles(M_pad, N_pad, K_pad, R_pad, itemsize, tile_m)
    M_pad = _round_up(M_pad, TM)
    N_pad = _round_up(N_pad, TN)

    # Pre-transpose + zero-pad the factors once, wrapper-side (no in-kernel transpose).
    a_t = jnp.zeros((K_pad, R_pad), dtype).at[:K, :r].set(a_r.T.astype(dtype))
    b_t = jnp.zeros((R_pad, N_pad), dtype).at[:r, :N].set(b_r.T.astype(dtype))
    x_pad = jnp.zeros((M_pad, K_pad), dtype).at[:M, :K].set(x2d)

    in_specs = [
        pl.BlockSpec((TM, K_pad), lambda i, j: (i, 0)),     # x: streamed per M tile
        pl.BlockSpec((K_pad, R_pad), lambda i, j: (0, 0)),  # A^T: VMEM-resident
        pl.BlockSpec((R_pad, TN), lambda i, j: (0, j)),     # B^T: streamed per N tile
    ]
    args = [x_pad, a_t, b_t]
    if bias is not None:
        bias_pad = jnp.zeros((1, N_pad), dtype).at[0, :N].set(bias.astype(dtype))
        in_specs.append(pl.BlockSpec((1, TN), lambda i, j: (0, j)))  # bias per N tile
        args.append(bias_pad)
        kernel = _low_rank_kernel_bias
    else:
        kernel = _low_rank_kernel_nobias

    # VMEM estimate (double-buffered streamed tiles + resident weights) + headroom.
    est = (2 * TM * (K_pad + TN) * itemsize
           + 2 * (K_pad * R_pad + R_pad * TN + 8 * TN) * itemsize)
    vmem_limit = int(min(max(2 * est, 16 * 2**20), 48 * 2**20))

    cost = pl.CostEstimate(
        flops=2 * M_pad * K_pad * R_pad + 2 * M_pad * R_pad * N_pad,
        transcendentals=0,
        bytes_accessed=itemsize * (M_pad * K_pad + K_pad * R_pad + R_pad * N_pad
                                   + N_pad + M_pad * N_pad),
    )

    y_pad = pl.pallas_call(
        kernel,
        out_shape=jax.ShapeDtypeStruct((M_pad, N_pad), dtype),
        grid_spec=pltpu.PrefetchScalarGridSpec(
            num_scalar_prefetch=0,
            grid=(M_pad // TM, N_pad // TN),
            in_specs=in_specs,
            out_specs=pl.BlockSpec((TM, TN), lambda i, j: (i, j)),
        ),
        compiler_params=pltpu.CompilerParams(
            dimension_semantics=("parallel", "parallel"),
            vmem_limit_bytes=vmem_limit,
        ),
        cost_estimate=cost,
    )(*args)

    return y_pad[:M, :N]


# --------------------------------------------------------------------------------------
# Plain-JAX glue mirroring the module (init + forward dispatch + rank determination)
# --------------------------------------------------------------------------------------
def _kaiming_uniform(key, shape, fan_in):
    # kaiming_uniform_ with a = sqrt(5): bound = sqrt(6 / ((1 + a^2) * fan_in)) = 1/sqrt(fan_in)
    bound = 1.0 / math.sqrt(fan_in)
    return jax.random.uniform(key, shape, jnp.float32, -bound, bound)


class InRankEfficientJax:
    def __init__(self, in_features, out_features, key, *, bias=True, init_scale=1.0,
                 init_modes=4, buffer_modes=4, explained_ratio_threshold=0.9,
                 warmup_iter=10, stage="stage_1", gap_iter=5):
        max_rank = int(min(in_features, out_features) / 2)
        kA, kB = jax.random.split(key)
        self.A = _kaiming_uniform(kA, (max_rank, in_features), in_features) * init_scale
        self.B = _kaiming_uniform(kB, (out_features, max_rank), max_rank) * init_scale
        self.bias = jnp.zeros((out_features,), jnp.float32) if bias else None
        self.init_modes = init_modes
        self.buffer_modes = buffer_modes
        self.explained_ratio_threshold = explained_ratio_threshold
        self.warmup_iter = warmup_iter
        self.stage = stage
        self.gap_iter = gap_iter
        self.max_modes = max_rank
        self.current_modes = init_modes
        self.iter = 0

    def _compute_explained_variance(self, s_max, s):
        s_current = s.at[s_max:].set(0.0)
        return 1.0 - jnp.var(s - s_current) / jnp.var(s)

    def _rank_determination(self):
        # TODO(synk): SVD (jnp.linalg.svd) has no Pallas equivalent; runs as plain JAX glue
        # (fires only every `gap_iter` steps after warmup).
        r = self.current_modes + self.buffer_modes
        matrix = (self.A[:r, :].T @ self.B[:, :r].T).astype(jnp.float32)
        s = jnp.linalg.svd(matrix, compute_uv=False)
        if self.current_modes < self.max_modes - self.buffer_modes:
            index = self.current_modes
            for index in range(self.current_modes,
                               min(self.current_modes + self.buffer_modes,
                                   self.max_modes - self.buffer_modes)):
                ratio = float(self._compute_explained_variance(index, s))
                if ratio > self.explained_ratio_threshold:
                    break
            self.current_modes = index

    def forward(self, x):
        self.iter += 1
        if self.stage == "stage_2":
            r = self.current_modes
        else:
            if self.iter > self.warmup_iter and self.iter % self.gap_iter == 0:
                self._rank_determination()
            r = self.current_modes + self.buffer_modes

        # Static slice of the low-rank factors (r is a Python int, as in the PyTorch module);
        # the wrapper pads r up to a 128 bucket so the compiled kernel shape stays fixed.
        a_r = self.A[:r, :]
        b_r = self.B[:, :r]

        lead_shape = x.shape[:-1]
        x2d = x.reshape(-1, x.shape[-1])
        y2d = low_rank_matmul(x2d, a_r, b_r, self.bias)
        return y2d.reshape(*lead_shape, self.B.shape[0])


# --------------------------------------------------------------------------------------
# Demo / correctness check
# --------------------------------------------------------------------------------------
if __name__ == "__main__":
    key = jax.random.PRNGKey(0)
    k_x, k_x2, k_params = jax.random.split(key, 3)

    in_features, out_features = 32, 32
    batch, seq = 2, 8

    layer = InRankEfficientJax(in_features, out_features, k_params,
                               bias=True, init_modes=4, buffer_modes=4,
                               explained_ratio_threshold=0.9,
                               warmup_iter=10, stage="stage_1", gap_iter=5)

    x = jax.random.normal(k_x, (batch, seq, in_features), jnp.float32)

    y = layer.forward(x)
    y = jax.block_until_ready(y)

    # Reference in plain JAX.
    r = layer.current_modes + layer.buffer_modes
    y_ref = (x.reshape(-1, in_features) @ layer.A[:r, :].T) @ layer.B[:, :r].T + layer.bias
    y_ref = y_ref.reshape(batch, seq, out_features)
    assert y.shape == (batch, seq, out_features)
    assert jnp.allclose(y, y_ref, atol=1e-5, rtol=1e-5)

    # Bias-free kernel variant.
    layer_nb = InRankEfficientJax(in_features, out_features, k_params,
                                  bias=False, init_modes=4, buffer_modes=4,
                                  explained_ratio_threshold=0.9,
                                  warmup_iter=10, stage="stage_1", gap_iter=5)
    y_nb = jax.block_until_ready(layer_nb.forward(x))
    y_nb_ref = ((x.reshape(-1, in_features) @ layer_nb.A[:r, :].T)
                @ layer_nb.B[:, :r].T).reshape(batch, seq, out_features)
    assert jnp.allclose(y_nb, y_nb_ref, atol=1e-5, rtol=1e-5)

    # Multi-M-tile path: force TM=128 so the grid is (2, 1) and index maps are exercised.
    x_big2d = jax.random.normal(k_x2, (256, in_features), jnp.float32)
    y_tiled = jax.block_until_ready(
        low_rank_matmul(x_big2d, layer.A[:r, :], layer.B[:, :r], layer.bias, tile_m=128))
    y_tiled_ref = (x_big2d @ layer.A[:r, :].T) @ layer.B[:, :r].T + layer.bias
    assert jnp.allclose(y_tiled, y_tiled_ref, atol=1e-5, rtol=1e-5)

    print("KERNEL_OK")
</pallas_src>

<mosaic_0001>
module attributes {stable_mosaic.version = 11 : i64} {
  func.func @_low_rank_kernel_bias(%arg0: i32, %arg1: i32, %arg2: memref<128x128xf32, #tpu.memory_space<vmem>>, %arg3: memref<128x128xf32, #tpu.memory_space<vmem>>, %arg4: memref<128x128xf32, #tpu.memory_space<vmem>>, %arg5: memref<1x128xf32, #tpu.memory_space<vmem>>, %arg6: memref<128x128xf32, #tpu.memory_space<vmem>>) attributes {dimension_semantics = [#tpu.dimension_semantics<parallel>, #tpu.dimension_semantics<parallel>], iteration_bounds = array<i64: 1, 1>, scalar_prefetch = 0 : i64, scratch_operands = 0 : i64, tpu.core_type = #tpu.core_type<tc>, window_params = [{transform_indices = @transform_0, window_bounds = array<i64: 128, 128>}, {pipeline_mode = #tpu.pipeline_mode<synchronous>, transform_indices = @transform_1, window_bounds = array<i64: 128, 128>}, {transform_indices = @transform_2, window_bounds = array<i64: 128, 128>}, {transform_indices = @transform_3, window_bounds = array<i64: 1, 128>}, {transform_indices = @transform_4, window_bounds = array<i64: 128, 128>}]} {
    %c0 = arith.constant 0 : index
    %c0_0 = arith.constant 0 : index
    %0 = vector.load %arg2[%c0, %c0_0] : memref<128x128xf32, #tpu.memory_space<vmem>>, vector<128x128xf32>
    %c0_1 = arith.constant 0 : index
    %c0_2 = arith.constant 0 : index
    %1 = vector.load %arg3[%c0_1, %c0_2] : memref<128x128xf32, #tpu.memory_space<vmem>>, vector<128x128xf32>
    %cst = arith.constant dense<0.000000e+00> : vector<128x128xf32>
    %2 = tpu.matmul %0, %1, %cst {dimension_numbers = #tpu.dot_dimension_numbers<[1], [0], [0], [1], [0, 0, 1, 1], [], []>} : vector<128x128xf32>, vector<128x128xf32>, vector<128x128xf32> -> vector<128x128xf32>
    %c0_3 = arith.constant 0 : index
    %c0_4 = arith.constant 0 : index
    %3 = vector.load %arg4[%c0_3, %c0_4] : memref<128x128xf32, #tpu.memory_space<vmem>>, vector<128x128xf32>
    %cst_5 = arith.constant dense<0.000000e+00> : vector<128x128xf32>
    %4 = tpu.matmul %2, %3, %cst_5 {dimension_numbers = #tpu.dot_dimension_numbers<[1], [0], [0], [1], [0, 0, 1, 1], [], []>} : vector<128x128xf32>, vector<128x128xf32>, vector<128x128xf32> -> vector<128x128xf32>
    %c0_6 = arith.constant 0 : index
    %c0_7 = arith.constant 0 : index
    %5 = vector.load %arg5[%c0_6, %c0_7] : memref<1x128xf32, #tpu.memory_space<vmem>>, vector<1x128xf32>
    %6 = vector.broadcast %5 : vector<1x128xf32> to vector<128x128xf32>
    %7 = arith.addf %4, %6 : vector<128x128xf32>
    %c0_8 = arith.constant 0 : index
    %c0_9 = arith.constant 0 : index
    %8 = vector.load %arg6[%c0_8, %c0_9] : memref<128x128xf32, #tpu.memory_space<vmem>>, vector<128x128xf32>
    tpu.vector_store %arg6[%c0_8, %c0_9], %7 {strides = array<i32>} : memref<128x128xf32, #tpu.memory_space<vmem>>, vector<128x128xf32>,
    return
  }
  func.func @transform_0(%arg0: i32, %arg1: i32) -> (i32, i32) {
    %c0_i32 = arith.constant 0 : i32
    %c0_i32_0 = arith.constant 0 : i32
    return %arg0, %c0_i32 : i32, i32
  }
  func.func @transform_1(%arg0: i32, %arg1: i32) -> (i32, i32) {
    %c0_i32 = arith.constant 0 : i32
    %c0_i32_0 = arith.constant 0 : i32
    %c0_i32_1 = arith.constant 0 : i32
    return %c0_i32, %c0_i32_0 : i32, i32
  }
  func.func @transform_2(%arg0: i32, %arg1: i32) -> (i32, i32) {
    %c0_i32 = arith.constant 0 : i32
    %c0_i32_0 = arith.constant 0 : i32
    return %c0_i32, %arg1 : i32, i32
  }
  func.func @transform_3(%arg0: i32, %arg1: i32) -> (i32, i32) {
    %c0_i32 = arith.constant 0 : i32
    %c0_i32_0 = arith.constant 0 : i32
    return %c0_i32, %arg1 : i32, i32
  }
  func.func @transform_4(%arg0: i32, %arg1: i32) -> (i32, i32) {
    %c0_i32 = arith.constant 0 : i32
    return %arg0, %arg1 : i32, i32
  }
}

</mosaic_0001>

<llo_original>
// kernel: tpu_custom_call.1
$region0: #{tpu_custom_call.1}
  #allocation0 [shape = 'u32[]', space=smem, size = 0x4, offset = 0x4, fixed_abs, tag = 'smem constant byte address 0x4 - core index']
  #allocation1 [shape = 'u32[144,128]{1,0:T(1,128)}', space=vmem, size = 0x12000, scoped, tag = 'internal scratch']
  %s0 = inlined_call_operand.hbm [shape: f32[128,128], index: 0, kind: input, shape index: {}]
  %s1 = inlined_call_operand.hbm [shape: f32[128,128], index: 1, kind: input, shape index: {}]
  %s2 = inlined_call_operand.hbm [shape: f32[128,128], index: 2, kind: input, shape index: {}]
  %s3 = inlined_call_operand.vmem [shape: f32[1,128], index: 3, kind: input, shape index: {}]
  %s4 = inlined_call_operand.hbm [shape: f32[128,128], index: 4, kind: output, shape index: {}]
  %s5 = sld [smem:[#allocation0]]
  $region38: #{tpu_custom_call.1} parent=0
    _
  %s7 = ssub.s32 1, %s5
  %s8 = scalar_select 0, %s7, %s5
  $region1: #{tpu_custom_call.1} parent=0
    #allocation2 [shape = 'u8[65536]{0}', space=vmem, size = 0x10000, scoped, tag = 'input window, operand 0, single buffered']
    #allocation3 [shape = 's32[1]{0}', space=sflag, size = 0x4, scoped, tag = 'scoped memory for tpu_custom_call.1']
    #allocation4 [shape = 's32[1]{0}', space=sflag, size = 0x4, scoped, tag = 'scoped memory for tpu_custom_call.1']
    #allocation5 [shape = 'u8[65536]{0}', space=vmem, size = 0x10000, scoped, tag = 'input window, operand 1, single buffered']
    #allocation6 [shape = 's32[1]{0}', space=sflag, size = 0x4, scoped, tag = 'scoped memory for tpu_custom_call.1']
    #allocation7 [shape = 'u8[65536]{0}', space=vmem, size = 0x10000, scoped, tag = 'input window, operand 2, single buffered']
    #allocation8 [shape = 'u8[65536]{0}', space=vmem, size = 0x10000, scoped, tag = 'output window, operand 0, single buffered']
    %9 = vsyncpa [#allocation3], 0
    %10 = vsyncpa [#allocation6], 0
    %11 = vsyncpa [#allocation4], 0
    // Predicated region
    $region2: #{tpu_custom_call.1} parent=1 // pred_check
      _
    $region3: #{tpu_custom_call.1} parent=1 // pred_check_branch
      %13 = sbr.rel (0) target = $region5
    $region4: #{tpu_custom_call.1} parent=1 // pred_region
      %s15 = ssub.s32 2048, 2048
      %16 = vsyncadd [#allocation3], %s15
      %s17 = sshll.u32 [#allocation2], 4
      %s18 = int_to_ptr.vmem [resolvable:$true] %s17
      %23 = dma.hbm_to_vmem [thread:$0]  %s0, 2048, %s18, [#allocation3], 128, 128, 8
    $region5: #{tpu_custom_call.1} parent=1 // pred_fallthru
      _
    // Predicated region
    $region6: #{tpu_custom_call.1} parent=1 // pred_check
      _
    $region7: #{tpu_custom_call.1} parent=1 // pred_check_branch
      %25 = sbr.rel (0) target = $region9
    $region8: #{tpu_custom_call.1} parent=1 // pred_region
      %s27 = ssub.s32 2048, 2048
      %28 = vsyncadd [#allocation6], %s27
      %s29 = sshll.u32 [#allocation5], 4
      %s30 = int_to_ptr.vmem [resolvable:$true] %s29
      %35 = dma.hbm_to_vmem [thread:$0]  %s1, 2048, %s30, [#allocation6], 128, 128, 8
    $region9: #{tpu_custom_call.1} parent=1 // pred_fallthru
      _
    // Predicated region
    $region10: #{tpu_custom_call.1} parent=1 // pred_check
      _
    $region11: #{tpu_custom_call.1} parent=1 // pred_check_branch
      %37 = sbr.rel (0) target = $region13
    $region12: #{tpu_custom_call.1} parent=1 // pred_region
      %s39 = ssub.s32 2048, 2048
      %40 = vsyncadd [#allocation6], %s39
      %s41 = sshll.u32 [#allocation7], 4
      %s42 = int_to_ptr.vmem [resolvable:$true] %s41
      %47 = dma.hbm_to_vmem [thread:$0]  %s2, 2048, %s42, [#allocation6], 128, 128, 8
    $region13: #{tpu_custom_call.1} parent=1 // pred_fallthru
      _
    // Predicated region
    $region14: #{tpu_custom_call.1} parent=1 // pred_check
      _
    $region15: #{tpu_custom_call.1} parent=1 // pred_check_branch
      %49 = sbr.rel (0) target = $region17
    $region16: #{tpu_custom_call.1} parent=1 // pred_region
      _
    $region17: #{tpu_custom_call.1} parent=1 // pred_fallthru
      _
    // Predicated region
    $region18: #{tpu_custom_call.1} parent=1 // pred_check
      _
    $region19: #{tpu_custom_call.1} parent=1 // pred_check_branch
      %51 = sbr.rel (0) target = $region21
    $region20: #{tpu_custom_call.1} parent=1 // pred_region
      %52 = dma.done [#allocation3], 2048
    $region21: #{tpu_custom_call.1} parent=1 // pred_fallthru
      _
    // Predicated region
    $region22: #{tpu_custom_call.1} parent=1 // pred_check
      _
    $region23: #{tpu_custom_call.1} parent=1 // pred_check_branch
      %54 = sbr.rel (0) target = $region25
    $region24: #{tpu_custom_call.1} parent=1 // pred_region
      %55 = dma.done [#allocation6], 2048
    $region25: #{tpu_custom_call.1} parent=1 // pred_fallthru
      _
    // Predicated region
    $region26: #{tpu_custom_call.1} parent=1 // pred_check
      _
    $region27: #{tpu_custom_call.1} parent=1 // pred_check_branch
      %57 = sbr.rel (0) target = $region29
    $region28: #{tpu_custom_call.1} parent=1 // pred_region
      %58 = dma.done [#allocation6], 2048
    $region29: #{tpu_custom_call.1} parent=1 // pred_fallthru
      _
    %v59 = vld [vmem:[#allocation2] sm:$0xff]
    %v60 = vld [vmem:[#allocation2 + $0x8] sm:$0xff]
    %v61 = vld [vmem:[#allocation2 + $0x10] sm:$0xff]
    %v62 = vld [vmem:[#allocation2 + $0x18] sm:$0xff]
    %v63 = vld [vmem:[#allocation2 + $0x20] sm:$0xff]
    %v64 = vld [vmem:[#allocation2 + $0x28] sm:$0xff]
    %v65 = vld [vmem:[#allocation2 + $0x30] sm:$0xff]
    %v66 = vld [vmem:[#allocation2 + $0x38] sm:$0xff]
    %v67 = vld [vmem:[#allocation2 + $0x40] sm:$0xff]
    %v68 = vld [vmem:[#allocation2 + $0x48] sm:$0xff]
    %v69 = vld [vmem:[#allocation2 + $0x50] sm:$0xff]
    %v70 = vld [vmem:[#allocation2 + $0x58] sm:$0xff]
    %v71 = vld [vmem:[#allocation2 + $0x60] sm:$0xff]
    %v72 = vld [vmem:[#allocation2 + $0x68] sm:$0xff]
    %v73 = vld [vmem:[#allocation2 + $0x70] sm:$0xff]
    %v74 = vld [vmem:[#allocation2 + $0x78] sm:$0xff]
    %v75 = vld [vmem:[#allocation5] sm:$0xff]
    %v76 = vld [vmem:[#allocation5 + $0x8] sm:$0xff]
    %v77 = vld [vmem:[#allocation5 + $0x10] sm:$0xff]
    %v78 = vld [vmem:[#allocation5 + $0x18] sm:$0xff]
    %v79 = vld [vmem:[#allocation5 + $0x20] sm:$0xff]
    %v80 = vld [vmem:[#allocation5 + $0x28] sm:$0xff]
    %v81 = vld [vmem:[#allocation5 + $0x30] sm:$0xff]
    %v82 = vld [vmem:[#allocation5 + $0x38] sm:$0xff]
    %v83 = vld [vmem:[#allocation5 + $0x40] sm:$0xff]
    %v84 = vld [vmem:[#allocation5 + $0x48] sm:$0xff]
    %v85 = vld [vmem:[#allocation5 + $0x50] sm:$0xff]
    %v86 = vld [vmem:[#allocation5 + $0x58] sm:$0xff]
    %v87 = vld [vmem:[#allocation5 + $0x60] sm:$0xff]
    %v88 = vld [vmem:[#allocation5 + $0x68] sm:$0xff]
    %v89 = vld [vmem:[#allocation5 + $0x70] sm:$0xff]
    %v90 = vld [vmem:[#allocation5 + $0x78] sm:$0xff]
    %91 = vmatprep.subr.mxu0 0.0
    %92 = vmatpush1.msra.mxu0 %v75
    %93 = vmatprep.subr.mxu0 0.0
    %94 = vmatpush1.msra.mxu0 %v76
    %95 = vmatprep.subr.mxu0 0.0
    %96 = vmatpush1.msra.mxu0 %v77
    %97 = vmatprep.subr.mxu0 0.0
    %98 = vmatpush1.msra.mxu0 %v78
    %99 = vmatprep.subr.mxu0 0.0
    %100 = vmatpush1.msra.mxu0 %v79
    %101 = vmatprep.subr.mxu0 0.0
    %102 = vmatpush1.msra.mxu0 %v80
    %103 = vmatprep.subr.mxu0 0.0
    %104 = vmatpush1.msra.mxu0 %v81
    %105 = vmatprep.subr.mxu0 0.0
    %106 = vmatpush1.msra.mxu0 %v82
    %107 = vmatprep.subr.mxu0 0.0
    %108 = vmatpush1.msra.mxu0 %v83
    %109 = vmatprep.subr.mxu0 0.0
    %110 = vmatpush1.msra.mxu0 %v84
    %111 = vmatprep.subr.mxu0 0.0
    %112 = vmatpush1.msra.mxu0 %v85
    %113 = vmatprep.subr.mxu0 0.0
    %114 = vmatpush1.msra.mxu0 %v86
    %115 = vmatprep.subr.mxu0 0.0
    %116 = vmatpush1.msra.mxu0 %v87
    %117 = vmatprep.subr.mxu0 0.0
    %118 = vmatpush1.msra.mxu0 %v88
    %119 = vmatprep.subr.mxu0 0.0
    %120 = vmatpush1.msra.mxu0 %v89
    %121 = vmatprep.subr.mxu0 0.0
    %122 = vmatpush1.msra.mxu0 %v90
    %123 = vmatprep.subr.mxu0 0.0
    %124 = vmatpush1.msra.mxu0 0.0
    %125 = vmatprep.subr.mxu0 0.0
    %126 = vmatpush1.msra.mxu0 0.0
    %127 = vmatprep.subr.mxu0 0.0
    %128 = vmatpush1.msra.mxu0 0.0
    %129 = vmatprep.subr.mxu0 0.0
    %130 = vmatpush1.msra.mxu0 0.0
    %131 = vmatprep.subr.mxu0 0.0
    %132 = vmatpush1.msra.mxu0 0.0
    %133 = vmatprep.subr.mxu0 0.0
    %134 = vmatpush1.msra.mxu0 0.0
    %135 = vmatprep.subr.mxu0 0.0
    %136 = vmatpush1.msra.mxu0 0.0
    %137 = vmatprep.subr.mxu0 0.0
    %138 = vmatpush1.msra.mxu0 0.0
    %139 = vmatprep.subr.mxu0 0.0
    %140 = vmatpush1.msra.mxu0 0.0
    %141 = vmatprep.subr.mxu0 0.0
    %142 = vmatpush1.msra.mxu0 0.0
    %143 = vmatprep.subr.mxu0 0.0
    %144 = vmatpush1.msra.mxu0 0.0
    %145 = vmatprep.subr.mxu0 0.0
    %146 = vmatpush1.msra.mxu0 0.0
    %147 = vmatprep.subr.mxu0 0.0
    %148 = vmatpush1.msra.mxu0 0.0
    %149 = vmatprep.subr.mxu0 0.0
    %150 = vmatpush1.msra.mxu0 0.0
    %151 = vmatprep.subr.mxu0 0.0
    %152 = vmatpush1.msra.mxu0 0.0
    %153 = vmatprep.subr.mxu0 0.0
    %154 = vmatpush1.msra.mxu0 0.0
    %155 = vmatprep.mubr.f32.mxu0 0.0
    %156 = vmatmul.mubr.f32.gmra.mrb[0].mxu0 %v59
    %v157 = vpop.f32.mrb[0].mxu0
    %v158 = vadd.f32 0.0, %v157
    %v159 = vpop.f32.mrb[0].mxu0
    %160 = vmatprep.mubr.f32.mxu0 0.0
    %161 = vmatmul.mubr.f32.gmra.mrb[0].mxu0 %v60
    %v162 = vpop.f32.mrb[0].mxu0
    %v163 = vadd.f32 0.0, %v162
    %v164 = vpop.f32.mrb[0].mxu0
    %165 = vmatprep.mubr.f32.mxu0 0.0
    %166 = vmatmul.mubr.f32.gmra.mrb[0].mxu0 %v61
    %v167 = vpop.f32.mrb[0].mxu0
    %v168 = vadd.f32 0.0, %v167
    %v169 = vpop.f32.mrb[0].mxu0
    %170 = vmatprep.mubr.f32.mxu0 0.0
    %171 = vmatmul.mubr.f32.gmra.mrb[0].mxu0 %v62
    %v172 = vpop.f32.mrb[0].mxu0
    %v173 = vadd.f32 0.0, %v172
    %v174 = vpop.f32.mrb[0].mxu0
    %175 = vmatprep.mubr.f32.mxu0 0.0
    %176 = vmatmul.mubr.f32.gmra.mrb[0].mxu0 %v63
    %v177 = vpop.f32.mrb[0].mxu0
    %v178 = vadd.f32 0.0, %v177
    %v179 = vpop.f32.mrb[0].mxu0
    %180 = vmatprep.mubr.f32.mxu0 0.0
    %181 = vmatmul.mubr.f32.gmra.mrb[0].mxu0 %v64
    %v182 = vpop.f32.mrb[0].mxu0
    %v183 = vadd.f32 0.0, %v182
    %v184 = vpop.f32.mrb[0].mxu0
    %185 = vmatprep.mubr.f32.mxu0 0.0
    %186 = vmatmul.mubr.f32.gmra.mrb[0].mxu0 %v65
    %v187 = vpop.f32.mrb[0].mxu0
    %v188 = vadd.f32 0.0, %v187
    %v189 = vpop.f32.mrb[0].mxu0
    %190 = vmatprep.mubr.f32.mxu0 0.0
    %191 = vmatmul.mubr.f32.gmra.mrb[0].mxu0 %v66
    %v192 = vpop.f32.mrb[0].mxu0
    %v193 = vadd.f32 0.0, %v192
    %v194 = vpop.f32.mrb[0].mxu0
    %195 = vmatprep.mubr.f32.mxu0 0.0
    %196 = vmatmul.mubr.f32.gmra.mrb[0].mxu0 %v67
    %v197 = vpop.f32.mrb[0].mxu0
    %v198 = vadd.f32 0.0, %v197
    %v199 = vpop.f32.mrb[0].mxu0
    %200 = vmatprep.mubr.f32.mxu0 0.0
    %201 = vmatmul.mubr.f32.gmra.mrb[0].mxu0 %v68
    %v202 = vpop.f32.mrb[0].mxu0
    %v203 = vadd.f32 0.0, %v202
    %v204 = vpop.f32.mrb[0].mxu0
    %205 = vmatprep.mubr.f32.mxu0 0.0
    %206 = vmatmul.mubr.f32.gmra.mrb[0].mxu0 %v69
    %v207 = vpop.f32.mrb[0].mxu0
    %v208 = vadd.f32 0.0, %v207
    %v209 = vpop.f32.mrb[0].mxu0
    %210 = vmatprep.mubr.f32.mxu0 0.0
    %211 = vmatmul.mubr.f32.gmra.mrb[0].mxu0 %v70
    %v212 = vpop.f32.mrb[0].mxu0
    %v213 = vadd.f32 0.0, %v212
    %v214 = vpop.f32.mrb[0].mxu0
    %215 = vmatprep.mubr.f32.mxu0 0.0
    %216 = vmatmul.mubr.f32.gmra.mrb[0].mxu0 %v71
    %v217 = vpop.f32.mrb[0].mxu0
    %v218 = vadd.f32 0.0, %v217
    %v219 = vpop.f32.mrb[0].mxu0
    %220 = vmatprep.mubr.f32.mxu0 0.0
    %221 = vmatmul.mubr.f32.gmra.mrb[0].mxu0 %v72
    %v222 = vpop.f32.mrb[0].mxu0
    %v223 = vadd.f32 0.0, %v222
    %v224 = vpop.f32.mrb[0].mxu0
    %225 = vmatprep.mubr.f32.mxu0 0.0
    %226 = vmatmul.mubr.f32.gmra.mrb[0].mxu0 %v73
    %v227 = vpop.f32.mrb[0].mxu0
    %v228 = vadd.f32 0.0, %v227
    %v229 = vpop.f32.mrb[0].mxu0
    %230 = vmatprep.mubr.f32.mxu0 0.0
    %231 = vmatmul.mubr.f32.gmra.mrb[0].mxu0 %v74
    %v232 = vpop.f32.mrb[0].mxu0
    %v233 = vadd.f32 0.0, %v232
    %v234 = vpop.f32.mrb[0].mxu0
    %235 = vdwg.mxu0
    %v236 = vld [vmem:[#allocation7] sm:$0xff]
    %v237 = vld [vmem:[#allocation7 + $0x8] sm:$0xff]
    %v238 = vld [vmem:[#allocation7 + $0x10] sm:$0xff]
    %v239 = vld [vmem:[#allocation7 + $0x18] sm:$0xff]
    %v240 = vld [vmem:[#allocation7 + $0x20] sm:$0xff]
    %v241 = vld [vmem:[#allocation7 + $0x28] sm:$0xff]
    %v242 = vld [vmem:[#allocation7 + $0x30] sm:$0xff]
    %v243 = vld [vmem:[#allocation7 + $0x38] sm:$0xff]
    %v244 = vld [vmem:[#allocation7 + $0x40] sm:$0xff]
    %v245 = vld [vmem:[#allocation7 + $0x48] sm:$0xff]
    %v246 = vld [vmem:[#allocation7 + $0x50] sm:$0xff]
    %v247 = vld [vmem:[#allocation7 + $0x58] sm:$0xff]
    %v248 = vld [vmem:[#allocation7 + $0x60] sm:$0xff]
    %v249 = vld [vmem:[#allocation7 + $0x68] sm:$0xff]
    %v250 = vld [vmem:[#allocation7 + $0x70] sm:$0xff]
    %v251 = vld [vmem:[#allocation7 + $0x78] sm:$0xff]
    %v252 = vld [vmem:[%s3] sm:$0x1]
    %v254 = vlaneseq
    %v255 = vshrl.u32 %v254, 7
    %v256 = vsub.s32 0, %v255
    %v257 = vrot.slane %v252, %v256
    %259 = vmatprep.subr.mxu0 0.0
    %260 = vmatpush1.msra.mxu0 %v236
    %261 = vmatprep.subr.mxu0 0.0
    %262 = vmatpush1.msra.mxu0 %v237
    %263 = vmatprep.subr.mxu0 0.0
    %264 = vmatpush1.msra.mxu0 %v238
    %265 = vmatprep.subr.mxu0 0.0
    %266 = vmatpush1.msra.mxu0 %v239
    %267 = vmatprep.subr.mxu0 0.0
    %268 = vmatpush1.msra.mxu0 %v240
    %269 = vmatprep.subr.mxu0 0.0
    %270 = vmatpush1.msra.mxu0 %v241
    %271 = vmatprep.subr.mxu0 0.0
    %272 = vmatpush1.msra.mxu0 %v242
    %273 = vmatprep.subr.mxu0 0.0
    %274 = vmatpush1.msra.mxu0 %v243
    %275 = vmatprep.subr.mxu0 0.0
    %276 = vmatpush1.msra.mxu0 %v244
    %277 = vmatprep.subr.mxu0 0.0
    %278 = vmatpush1.msra.mxu0 %v245
    %279 = vmatprep.subr.mxu0 0.0
    %280 = vmatpush1.msra.mxu0 %v246
    %281 = vmatprep.subr.mxu0 0.0
    %282 = vmatpush1.msra.mxu0 %v247
    %283 = vmatprep.subr.mxu0 0.0
    %284 = vmatpush1.msra.mxu0 %v248
    %285 = vmatprep.subr.mxu0 0.0
    %286 = vmatpush1.msra.mxu0 %v249
    %287 = vmatprep.subr.mxu0 0.0
    %288 = vmatpush1.msra.mxu0 %v250
    %289 = vmatprep.subr.mxu0 0.0
    %290 = vmatpush1.msra.mxu0 %v251
    %291 = vmatprep.subr.mxu0 0.0
    %292 = vmatpush1.msra.mxu0 0.0
    %293 = vmatprep.subr.mxu0 0.0
    %294 = vmatpush1.msra.mxu0 0.0
    %295 = vmatprep.subr.mxu0 0.0
    %296 = vmatpush1.msra.mxu0 0.0
    %297 = vmatprep.subr.mxu0 0.0
    %298 = vmatpush1.msra.mxu0 0.0
    %299 = vmatprep.subr.mxu0 0.0
    %300 = vmatpush1.msra.mxu0 0.0
    %301 = vmatprep.subr.mxu0 0.0
    %302 = vmatpush1.msra.mxu0 0.0
    %303 = vmatprep.subr.mxu0 0.0
    %304 = vmatpush1.msra.mxu0 0.0
    %305 = vmatprep.subr.mxu0 0.0
    %306 = vmatpush1.msra.mxu0 0.0
    %307 = vmatprep.subr.mxu0 0.0
    %308 = vmatpush1.msra.mxu0 0.0
    %309 = vmatprep.subr.mxu0 0.0
    %310 = vmatpush1.msra.mxu0 0.0
    %311 = vmatprep.subr.mxu0 0.0
    %312 = vmatpush1.msra.mxu0 0.0
    %313 = vmatprep.subr.mxu0 0.0
    %314 = vmatpush1.msra.mxu0 0.0
    %315 = vmatprep.subr.mxu0 0.0
    %316 = vmatpush1.msra.mxu0 0.0
    %317 = vmatprep.subr.mxu0 0.0
    %318 = vmatpush1.msra.mxu0 0.0
    %319 = vmatprep.subr.mxu0 0.0
    %320 = vmatpush1.msra.mxu0 0.0
    %321 = vmatprep.subr.mxu0 0.0
    %322 = vmatpush1.msra.mxu0 0.0
    %323 = vmatprep.mubr.f32.mxu0 0.0
    %324 = vmatmul.mubr.f32.gmra.mrb[0].mxu0 %v158
    %v325 = vpop.f32.mrb[0].mxu0
    %v326 = vadd.f32 %v257, %v325
    %v327 = vpop.f32.mrb[0].mxu0
    %328 = vmatprep.mubr.f32.mxu0 0.0
    %329 = vmatmul.mubr.f32.gmra.mrb[0].mxu0 %v163
    %v330 = vpop.f32.mrb[0].mxu0
    %v331 = vadd.f32 %v257, %v330
    %v332 = vpop.f32.mrb[0].mxu0
    %333 = vmatprep.mubr.f32.mxu0 0.0
    %334 = vmatmul.mubr.f32.gmra.mrb[0].mxu0 %v168
    %v335 = vpop.f32.mrb[0].mxu0
    %v336 = vadd.f32 %v257, %v335
    %v337 = vpop.f32.mrb[0].mxu0
    %338 = vmatprep.mubr.f32.mxu0 0.0
    %339 = vmatmul.mubr.f32.gmra.mrb[0].mxu0 %v173
    %v340 = vpop.f32.mrb[0].mxu0
    %v341 = vadd.f32 %v257, %v340
    %v342 = vpop.f32.mrb[0].mxu0
    %343 = vmatprep.mubr.f32.mxu0 0.0
    %344 = vmatmul.mubr.f32.gmra.mrb[0].mxu0 %v178
    %v345 = vpop.f32.mrb[0].mxu0
    %v346 = vadd.f32 %v257, %v345
    %v347 = vpop.f32.mrb[0].mxu0
    %348 = vmatprep.mubr.f32.mxu0 0.0
    %349 = vmatmul.mubr.f32.gmra.mrb[0].mxu0 %v183
    %v350 = vpop.f32.mrb[0].mxu0
    %v351 = vadd.f32 %v257, %v350
    %v352 = vpop.f32.mrb[0].mxu0
    %353 = vmatprep.mubr.f32.mxu0 0.0
    %354 = vmatmul.mubr.f32.gmra.mrb[0].mxu0 %v188
    %v355 = vpop.f32.mrb[0].mxu0
    %v356 = vadd.f32 %v257, %v355
    %v357 = vpop.f32.mrb[0].mxu0
    %358 = vmatprep.mubr.f32.mxu0 0.0
    %359 = vmatmul.mubr.f32.gmra.mrb[0].mxu0 %v193
    %v360 = vpop.f32.mrb[0].mxu0
    %v361 = vadd.f32 %v257, %v360
    %v362 = vpop.f32.mrb[0].mxu0
    %363 = vmatprep.mubr.f32.mxu0 0.0
    %364 = vmatmul.mubr.f32.gmra.mrb[0].mxu0 %v198
    %v365 = vpop.f32.mrb[0].mxu0
    %v366 = vadd.f32 %v257, %v365
    %v367 = vpop.f32.mrb[0].mxu0
    %368 = vmatprep.mubr.f32.mxu0 0.0
    %369 = vmatmul.mubr.f32.gmra.mrb[0].mxu0 %v203
    %v370 = vpop.f32.mrb[0].mxu0
    %v371 = vadd.f32 %v257, %v370
    %v372 = vpop.f32.mrb[0].mxu0
    %373 = vmatprep.mubr.f32.mxu0 0.0
    %374 = vmatmul.mubr.f32.gmra.mrb[0].mxu0 %v208
    %v375 = vpop.f32.mrb[0].mxu0
    %v376 = vadd.f32 %v257, %v375
    %v377 = vpop.f32.mrb[0].mxu0
    %378 = vmatprep.mubr.f32.mxu0 0.0
    %379 = vmatmul.mubr.f32.gmra.mrb[0].mxu0 %v213
    %v380 = vpop.f32.mrb[0].mxu0
    %v381 = vadd.f32 %v257, %v380
    %v382 = vpop.f32.mrb[0].mxu0
    %383 = vmatprep.mubr.f32.mxu0 0.0
    %384 = vmatmul.mubr.f32.gmra.mrb[0].mxu0 %v218
    %v385 = vpop.f32.mrb[0].mxu0
    %v386 = vadd.f32 %v257, %v385
    %v387 = vpop.f32.mrb[0].mxu0
    %388 = vmatprep.mubr.f32.mxu0 0.0
    %389 = vmatmul.mubr.f32.gmra.mrb[0].mxu0 %v223
    %v390 = vpop.f32.mrb[0].mxu0
    %v391 = vadd.f32 %v257, %v390
    %v392 = vpop.f32.mrb[0].mxu0
    %393 = vmatprep.mubr.f32.mxu0 0.0
    %394 = vmatmul.mubr.f32.gmra.mrb[0].mxu0 %v228
    %v395 = vpop.f32.mrb[0].mxu0
    %v396 = vadd.f32 %v257, %v395
    %v397 = vpop.f32.mrb[0].mxu0
    %398 = vmatprep.mubr.f32.mxu0 0.0
    %399 = vmatmul.mubr.f32.gmra.mrb[0].mxu0 %v233
    %v400 = vpop.f32.mrb[0].mxu0
    %v401 = vadd.f32 %v257, %v400
    %v402 = vpop.f32.mrb[0].mxu0
    %403 = vdwg.mxu0
    %404 = vst [vmem:[#allocation8] sm:$0xff] %v326
    %405 = vst [vmem:[#allocation8 + $0x8] sm:$0xff] %v331
    %406 = vst [vmem:[#allocation8 + $0x10] sm:$0xff] %v336
    %407 = vst [vmem:[#allocation8 + $0x18] sm:$0xff] %v341
    %408 = vst [vmem:[#allocation8 + $0x20] sm:$0xff] %v346
    %409 = vst [vmem:[#allocation8 + $0x28] sm:$0xff] %v351
    %410 = vst [vmem:[#allocation8 + $0x30] sm:$0xff] %v356
    %411 = vst [vmem:[#allocation8 + $0x38] sm:$0xff] %v361
    %412 = vst [vmem:[#allocation8 + $0x40] sm:$0xff] %v366
    %413 = vst [vmem:[#allocation8 + $0x48] sm:$0xff] %v371
    %414 = vst [vmem:[#allocation8 + $0x50] sm:$0xff] %v376
    %415 = vst [vmem:[#allocation8 + $0x58] sm:$0xff] %v381
    %416 = vst [vmem:[#allocation8 + $0x60] sm:$0xff] %v386
    %417 = vst [vmem:[#allocation8 + $0x68] sm:$0xff] %v391
    %418 = vst [vmem:[#allocation8 + $0x70] sm:$0xff] %v396
    %419 = vst [vmem:[#allocation8 + $0x78] sm:$0xff] %v401
    // Predicated region
    $region30: #{tpu_custom_call.1} parent=1 // pred_check
      _
    $region31: #{tpu_custom_call.1} parent=1 // pred_check_branch
      %421 = sbr.rel (0) target = $region33
    $region32: #{tpu_custom_call.1} parent=1 // pred_region
      %s423 = ssub.s32 2048, 2048
      %424 = vsyncadd [#allocation4], %s423
      %s425 = sshll.u32 [#allocation8], 4
      %s426 = int_to_ptr.vmem [resolvable:$true] %s425
      %431 = dma.vmem_to_hbm [thread:$0]  %s426, 2048, %s4, [#allocation4], 128, 128, 8
    $region33: #{tpu_custom_call.1} parent=1 // pred_fallthru
      _
    // Predicated region
    $region34: #{tpu_custom_call.1} parent=1 // pred_check
      _
    $region35: #{tpu_custom_call.1} parent=1 // pred_check_branch
      %433 = sbr.rel (0) target = $region37
    $region36: #{tpu_custom_call.1} parent=1 // pred_region
      %434 = dma.done [#allocation4], 2048
    $region37: #{tpu_custom_call.1} parent=1 // pred_fallthru
      _
    %435 = vsyncpa [#allocation3], 1
    %436 = vsyncpa [#allocation6], 1
    %437 = vsyncpa [#allocation4], 1

</llo_original>
